<compile_context>
chip_gen: v7x
topology: tpu7x:2x2x1
jax: 0.10.0
libtpu: 0.0.40
codegen_flags: <defaults>
</compile_context>

<pallas_src>
import math
import jax
import jax.numpy as jnp
from jax.experimental import pallas as pl
from jax.experimental.pallas import tpu as pltpu


def _swish(v):
    # exp lands on the EUP slot; exact sigmoid keeps 1e-5 parity with the ref.
    return v * jax.nn.sigmoid(v)


def init_kernel(xw_ref, rbf_ref, w_rbf_ref, b_rbf0_ref, w_r_ref, out_ref):
    """One edge tile.

    rbf_proj = rbf @ [W_rbf0 | W_rbf1]         (fused R -> 2H matmul)
    rbf0     = swish(rbf_proj[:, :H] + b_rbf0)
    e1       = swish(xw_sum + rbf0 @ W_r)      (xw_sum = x[i]W_xi + x[j]W_xj + b_lin)
    e2       = rbf_proj[:, H:] * e1
    out      = [e1 | e2]                       (lane-dense (TE, 2H) slab)
    """
    H = w_r_ref.shape[0]
    rbf = rbf_ref[...]

    rbf_proj = jnp.dot(rbf, w_rbf_ref[...], preferred_element_type=jnp.float32)
    rbf0 = _swish(rbf_proj[:, :H] + b_rbf0_ref[...])

    pre = xw_ref[...] + jnp.dot(rbf0, w_r_ref[...],
                                preferred_element_type=jnp.float32)
    e1 = _swish(pre)
    e2 = rbf_proj[:, H:] * e1

    out_ref[...] = jnp.concatenate([e1, e2], axis=-1)


def _round_up(n, m):
    return ((n + m - 1) // m) * m


def init_forward(x, rbf, i, j, params, *, tile_e=1024):
    """x: int32 (N,), rbf: f32 (E, R), i/j: int32 (E,). Returns (e1, e2)."""
    H = params["emb_weight"].shape[1]
    E, R = rbf.shape

    # ---- node-granularity work + gathers stay in plain JAX (glue) ----------
    x_emb = params["emb_weight"][x]                         # (N, H)
    proj_i = x_emb @ params["w_lin_xi"]                     # (N, H)
    proj_j = x_emb @ params["w_lin_xj"]                     # (N, H)
    xw_sum = proj_i[i] + proj_j[j] + params["b_lin"]        # (E, H)

    # Fuse the two rbf projection weights into one (R, 2H) matrix.
    w_rbf_both = jnp.concatenate([params["w_rbf0"], params["w_rbf1"]], axis=1)

    # ---- edge tiling (pad E to a multiple of the tile, multiple of 8) ------
    te = min(int(tile_e), _round_up(E, 8))
    te = _round_up(te, 8)
    e_pad = _round_up(E, te)
    if e_pad != E:
        pad = e_pad - E
        rbf_p = jnp.pad(rbf, ((0, pad), (0, 0)))
        xw_p = jnp.pad(xw_sum, ((0, pad), (0, 0)))
    else:
        rbf_p, xw_p = rbf, xw_sum

    grid = (e_pad // te,)

    out = pl.pallas_call(
        init_kernel,
        out_shape=jax.ShapeDtypeStruct((e_pad, 2 * H), jnp.float32),
        grid=grid,
        in_specs=[
            pl.BlockSpec((te, H), lambda e: (e, 0)),        # xw_sum  (edge tile)
            pl.BlockSpec((te, R), lambda e: (e, 0)),        # rbf     (edge tile)
            pl.BlockSpec((R, 2 * H), lambda e: (0, 0)),     # [W_rbf0 | W_rbf1]
            pl.BlockSpec((1, H), lambda e: (0, 0)),         # b_rbf0
            pl.BlockSpec((H, H), lambda e: (0, 0)),         # W_lin (rbf0 slice)
        ],
        out_specs=pl.BlockSpec((te, 2 * H), lambda e: (e, 0)),
        compiler_params=pltpu.CompilerParams(
            dimension_semantics=("parallel",),              # megacore on v7x
        ),
    )(xw_p, rbf_p, w_rbf_both, params["b_rbf0"], params["w_lin_r"])

    e1 = out[:E, :H]
    e2 = out[:E, H:]
    return e1, e2


def make_params(key, num_radial, hidden_channels):
    """Deterministic synthetic parameter init (shapes match the torch module)."""
    ks = jax.random.split(key, 6)
    H, R = hidden_channels, num_radial
    s3 = math.sqrt(3.0)

    emb_weight = jax.random.uniform(ks[0], (100, H), jnp.float32, -s3, s3)

    # lin_rbf_0: Linear(R, H); stored transposed (R, H) for right-multiply.
    bound0 = 1.0 / math.sqrt(R)
    w_rbf0 = jax.random.uniform(ks[1], (R, H), jnp.float32, -bound0, bound0)
    b_rbf0 = jax.random.uniform(ks[2], (1, H), jnp.float32, -bound0, bound0)

    # lin: Linear(3H, H); split its (3H, H) right-mul weight into 3 x (H, H).
    bound1 = 1.0 / math.sqrt(3 * H)
    w_lin = jax.random.uniform(ks[3], (3 * H, H), jnp.float32, -bound1, bound1)
    b_lin = jax.random.uniform(ks[4], (1, H), jnp.float32, -bound1, bound1)
    w_lin_xi, w_lin_xj, w_lin_r = w_lin[:H], w_lin[H:2 * H], w_lin[2 * H:]

    # lin_rbf_1: Linear(R, H, bias=False).
    # TODO(synk): exact glorot_orthogonal init not reproduced (orthogonalization step).
    std = math.sqrt(2.0 * 2.0 / (R + H))
    w_rbf1 = std * jax.random.normal(ks[5], (R, H), jnp.float32)

    return dict(
        emb_weight=emb_weight,
        w_rbf0=w_rbf0, b_rbf0=b_rbf0,
        w_lin_xi=w_lin_xi, w_lin_xj=w_lin_xj, w_lin_r=w_lin_r, b_lin=b_lin,
        w_rbf1=w_rbf1,
    )


def reference_forward(x, rbf, i, j, params):
    x_emb = params["emb_weight"][x]
    xi, xj = x_emb[i], x_emb[j]
    rbf0 = _swish(rbf @ params["w_rbf0"] + params["b_rbf0"])
    w_lin = jnp.concatenate(
        [params["w_lin_xi"], params["w_lin_xj"], params["w_lin_r"]], axis=0)
    e1 = _swish(jnp.concatenate([xi, xj, rbf0], axis=-1) @ w_lin + params["b_lin"])
    e2 = (rbf @ params["w_rbf1"]) * e1
    return e1, e2


if __name__ == "__main__":
    num_radial = 8
    hidden_channels = 32
    num_nodes = 6
    num_edges = 8

    key = jax.random.PRNGKey(0)
    kp, kx, kr, ki, kj = jax.random.split(key, 5)

    params = make_params(kp, num_radial, hidden_channels)

    x = jax.random.randint(kx, (num_nodes,), 0, 100, dtype=jnp.int32)   # atom types
    rbf = jax.random.normal(kr, (num_edges, num_radial), jnp.float32)   # dist_emb(dist)
    i = jax.random.randint(ki, (num_edges,), 0, num_nodes, dtype=jnp.int32)
    j = jax.random.randint(kj, (num_edges,), 0, num_nodes, dtype=jnp.int32)

    e1, e2 = init_forward(x, rbf, i, j, params)
    jax.block_until_ready((e1, e2))

    r1, r2 = reference_forward(x, rbf, i, j, params)
    assert jnp.allclose(e1, r1, atol=1e-5), "e1 mismatch"
    assert jnp.allclose(e2, r2, atol=1e-5), "e2 mismatch"

    # Exercise the tiled / padded path (E not a multiple of the tile) as well.
    E2 = 1000
    k2 = jax.random.split(key, 3)
    rbf_b = jax.random.normal(k2[0], (E2, num_radial), jnp.float32)
    i_b = jax.random.randint(k2[1], (E2,), 0, num_nodes, dtype=jnp.int32)
    j_b = jax.random.randint(k2[2], (E2,), 0, num_nodes, dtype=jnp.int32)
    e1b, e2b = init_forward(x, rbf_b, i_b, j_b, params, tile_e=256)
    jax.block_until_ready((e1b, e2b))
    r1b, r2b = reference_forward(x, rbf_b, i_b, j_b, params)
    assert jnp.allclose(e1b, r1b, atol=1e-5), "e1 (tiled) mismatch"
    assert jnp.allclose(e2b, r2b, atol=1e-5), "e2 (tiled) mismatch"

    print("KERNEL_OK")
</pallas_src>

<mosaic_0001>
module attributes {stable_mosaic.version = 11 : i64} {
  func.func @init_kernel(%arg0: i32, %arg1: memref<8x32xf32, #tpu.memory_space<vmem>>, %arg2: memref<8x8xf32, #tpu.memory_space<vmem>>, %arg3: memref<8x64xf32, #tpu.memory_space<vmem>>, %arg4: memref<1x32xf32, #tpu.memory_space<vmem>>, %arg5: memref<32x32xf32, #tpu.memory_space<vmem>>, %arg6: memref<8x64xf32, #tpu.memory_space<vmem>>) attributes {dimension_semantics = [#tpu.dimension_semantics<parallel>], iteration_bounds = array<i64: 1>, scalar_prefetch = 0 : i64, scratch_operands = 0 : i64, tpu.core_type = #tpu.core_type<tc>, window_params = [{transform_indices = @transform_0, window_bounds = array<i64: 8, 32>}, {transform_indices = @transform_1, window_bounds = array<i64: 8, 8>}, {pipeline_mode = #tpu.pipeline_mode<synchronous>, transform_indices = @transform_2, window_bounds = array<i64: 8, 64>}, {pipeline_mode = #tpu.pipeline_mode<synchronous>, transform_indices = @transform_3, window_bounds = array<i64: 1, 32>}, {pipeline_mode = #tpu.pipeline_mode<synchronous>, transform_indices = @transform_4, window_bounds = array<i64: 32, 32>}, {transform_indices = @transform_5, window_bounds = array<i64: 8, 64>}]} {
    %c0 = arith.constant 0 : index
    %c0_0 = arith.constant 0 : index
    %0 = vector.load %arg2[%c0, %c0_0] : memref<8x8xf32, #tpu.memory_space<vmem>>, vector<8x8xf32>
    %c0_1 = arith.constant 0 : index
    %c0_2 = arith.constant 0 : index
    %1 = vector.load %arg3[%c0_1, %c0_2] : memref<8x64xf32, #tpu.memory_space<vmem>>, vector<8x64xf32>
    %cst = arith.constant dense<0.000000e+00> : vector<8x64xf32>
    %2 = tpu.matmul %0, %1, %cst {dimension_numbers = #tpu.dot_dimension_numbers<[1], [0], [0], [1], [0, 0, 1, 1], [], []>} : vector<8x8xf32>, vector<8x64xf32>, vector<8x64xf32> -> vector<8x64xf32>
    %3 = vector.extract_strided_slice %2 {offsets = [0, 0], sizes = [8, 32], strides = [1, 1]} : vector<8x64xf32> to vector<8x32xf32>
    %c0_3 = arith.constant 0 : index
    %c0_4 = arith.constant 0 : index
    %4 = vector.load %arg4[%c0_3, %c0_4] : memref<1x32xf32, #tpu.memory_space<vmem>>, vector<1x32xf32>
    %5 = vector.broadcast %4 : vector<1x32xf32> to vector<8x32xf32>
    %6 = arith.addf %3, %5 : vector<8x32xf32>
    %7 = arith.negf %6 : vector<8x32xf32>
    %8 = math.exp %7 : vector<8x32xf32>
    %cst_5 = arith.constant 1.000000e+00 : f32
    %9 = vector.broadcast %cst_5 : f32 to vector<8x32xf32>
    %10 = arith.addf %9, %8 : vector<8x32xf32>
    %11 = arith.divf %9, %10 : vector<8x32xf32>
    %12 = arith.mulf %6, %11 : vector<8x32xf32>
    %c0_6 = arith.constant 0 : index
    %c0_7 = arith.constant 0 : index
    %13 = vector.load %arg1[%c0_6, %c0_7] : memref<8x32xf32, #tpu.memory_space<vmem>>, vector<8x32xf32>
    %c0_8 = arith.constant 0 : index
    %c0_9 = arith.constant 0 : index
    %14 = vector.load %arg5[%c0_8, %c0_9] : memref<32x32xf32, #tpu.memory_space<vmem>>, vector<32x32xf32>
    %cst_10 = arith.constant dense<0.000000e+00> : vector<8x32xf32>
    %15 = tpu.matmul %12, %14, %cst_10 {dimension_numbers = #tpu.dot_dimension_numbers<[1], [0], [0], [1], [0, 0, 1, 1], [], []>} : vector<8x32xf32>, vector<32x32xf32>, vector<8x32xf32> -> vector<8x32xf32>
    %16 = arith.addf %13, %15 : vector<8x32xf32>
    %17 = arith.negf %16 : vector<8x32xf32>
    %18 = math.exp %17 : vector<8x32xf32>
    %cst_11 = arith.constant 1.000000e+00 : f32
    %19 = vector.broadcast %cst_11 : f32 to vector<8x32xf32>
    %20 = arith.addf %19, %18 : vector<8x32xf32>
    %21 = arith.divf %19, %20 : vector<8x32xf32>
    %22 = arith.mulf %16, %21 : vector<8x32xf32>
    %23 = vector.extract_strided_slice %2 {offsets = [0, 32], sizes = [8, 32], strides = [1, 1]} : vector<8x64xf32> to vector<8x32xf32>
    %24 = arith.mulf %23, %22 : vector<8x32xf32>
    %25 = tpu.concatenate %22, %24 in 1 : vector<8x32xf32>, vector<8x32xf32> -> vector<8x64xf32>
    %c0_12 = arith.constant 0 : index
    %c0_13 = arith.constant 0 : index
    %26 = vector.load %arg6[%c0_12, %c0_13] : memref<8x64xf32, #tpu.memory_space<vmem>>, vector<8x64xf32>
    tpu.vector_store %arg6[%c0_12, %c0_13], %25 {strides = array<i32>} : memref<8x64xf32, #tpu.memory_space<vmem>>, vector<8x64xf32>,
    return
  }
  func.func @transform_0(%arg0: i32) -> (i32, i32) {
    %c0_i32 = arith.constant 0 : i32
    %c0_i32_0 = arith.constant 0 : i32
    return %arg0, %c0_i32 : i32, i32
  }
  func.func @transform_1(%arg0: i32) -> (i32, i32) {
    %c0_i32 = arith.constant 0 : i32
    %c0_i32_0 = arith.constant 0 : i32
    return %arg0, %c0_i32 : i32, i32
  }
  func.func @transform_2(%arg0: i32) -> (i32, i32) {
    %c0_i32 = arith.constant 0 : i32
    %c0_i32_0 = arith.constant 0 : i32
    %c0_i32_1 = arith.constant 0 : i32
    return %c0_i32, %c0_i32_0 : i32, i32
  }
  func.func @transform_3(%arg0: i32) -> (i32, i32) {
    %c0_i32 = arith.constant 0 : i32
    %c0_i32_0 = arith.constant 0 : i32
    %c0_i32_1 = arith.constant 0 : i32
    return %c0_i32, %c0_i32_0 : i32, i32
  }
  func.func @transform_4(%arg0: i32) -> (i32, i32) {
    %c0_i32 = arith.constant 0 : i32
    %c0_i32_0 = arith.constant 0 : i32
    %c0_i32_1 = arith.constant 0 : i32
    return %c0_i32, %c0_i32_0 : i32, i32
  }
  func.func @transform_5(%arg0: i32) -> (i32, i32) {
    %c0_i32 = arith.constant 0 : i32
    %c0_i32_0 = arith.constant 0 : i32
    return %arg0, %c0_i32 : i32, i32
  }
}

</mosaic_0001>

<llo_original>
// kernel: tpu_custom_call.1
$region0: #{tpu_custom_call.1}
  #allocation0 [shape = 'u32[]', space=smem, size = 0x4, offset = 0x4, fixed_abs, tag = 'smem constant byte address 0x4 - core index']
  #allocation1 [shape = 'u32[144,128]{1,0:T(1,128)}', space=vmem, size = 0x12000, scoped, tag = 'internal scratch']
  %s0 = inlined_call_operand.hbm [shape: f32[8,32], index: 0, kind: input, shape index: {}]
  %s1 = inlined_call_operand.hbm [shape: f32[8,8], index: 1, kind: input, shape index: {}]
  %s2 = inlined_call_operand.hbm [shape: f32[8,64], index: 2, kind: input, shape index: {}]
  %s3 = inlined_call_operand.vmem [shape: f32[1,32], index: 3, kind: input, shape index: {}]
  %s4 = inlined_call_operand.hbm [shape: f32[32,32], index: 4, kind: input, shape index: {}]
  %s5 = inlined_call_operand.hbm [shape: f32[8,64], index: 5, kind: output, shape index: {}]
  %s6 = sld [smem:[#allocation0]]
  $region46: #{tpu_custom_call.1} parent=0
    _
  %s8 = ssub.s32 1, %s6
  %s9 = scalar_select 0, %s8, %s6
  $region1: #{tpu_custom_call.1} parent=0
    #allocation2 [shape = 'u8[4096]{0}', space=vmem, size = 0x1000, scoped, tag = 'input window, operand 0, single buffered']
    #allocation3 [shape = 's32[1]{0}', space=sflag, size = 0x4, scoped, tag = 'scoped memory for tpu_custom_call.1']
    #allocation4 [shape = 's32[1]{0}', space=sflag, size = 0x4, scoped, tag = 'scoped memory for tpu_custom_call.1']
    #allocation5 [shape = 'u8[4096]{0}', space=vmem, size = 0x1000, scoped, tag = 'input window, operand 1, single buffered']
    #allocation6 [shape = 's32[1]{0}', space=sflag, size = 0x4, scoped, tag = 'scoped memory for tpu_custom_call.1']
    #allocation7 [shape = 'u8[4096]{0}', space=vmem, size = 0x1000, scoped, tag = 'input window, operand 2, single buffered']
    #allocation8 [shape = 'u8[16384]{0}', space=vmem, size = 0x4000, scoped, tag = 'input window, operand 4, single buffered']
    #allocation9 [shape = 's32[1]{0}', space=sflag, size = 0x4, scoped, tag = 'scoped memory for tpu_custom_call.1']
    #allocation10 [shape = 'u8[4096]{0}', space=vmem, size = 0x1000, scoped, tag = 'output window, operand 0, single buffered']
    %10 = vsyncpa [#allocation3], 0
    %11 = vsyncpa [#allocation6], 0
    %12 = vsyncpa [#allocation9], 0
    %13 = vsyncpa [#allocation4], 0
    // Predicated region
    $region2: #{tpu_custom_call.1} parent=1 // pred_check
      _
    $region3: #{tpu_custom_call.1} parent=1 // pred_check_branch
      %15 = sbr.rel (0) target = $region5
    $region4: #{tpu_custom_call.1} parent=1 // pred_region
      %s17 = ssub.s32 128, 128
      %18 = vsyncadd [#allocation3], %s17
      %s20 = sshll.u32 [#allocation2], 4
      %s21 = int_to_ptr.vmem [resolvable:$true] %s20
      %23 = dma.hbm_to_vmem [thread:$0]  %s0, 128, %s21, [#allocation3]
    $region5: #{tpu_custom_call.1} parent=1 // pred_fallthru
      _
    // Predicated region
    $region6: #{tpu_custom_call.1} parent=1 // pred_check
      _
    $region7: #{tpu_custom_call.1} parent=1 // pred_check_branch
      %25 = sbr.rel (0) target = $region9
    $region8: #{tpu_custom_call.1} parent=1 // pred_region
      %s27 = ssub.s32 128, 128
      %28 = vsyncadd [#allocation6], %s27
      %s30 = sshll.u32 [#allocation5], 4
      %s31 = int_to_ptr.vmem [resolvable:$true] %s30
      %33 = dma.hbm_to_vmem [thread:$0]  %s1, 128, %s31, [#allocation6]
    $region9: #{tpu_custom_call.1} parent=1 // pred_fallthru
      _
    // Predicated region
    $region10: #{tpu_custom_call.1} parent=1 // pred_check
      _
    $region11: #{tpu_custom_call.1} parent=1 // pred_check_branch
      %35 = sbr.rel (0) target = $region13
    $region12: #{tpu_custom_call.1} parent=1 // pred_region
      %s37 = ssub.s32 128, 128
      %38 = vsyncadd [#allocation6], %s37
      %s40 = sshll.u32 [#allocation7], 4
      %s41 = int_to_ptr.vmem [resolvable:$true] %s40
      %43 = dma.hbm_to_vmem [thread:$0]  %s2, 128, %s41, [#allocation6]
    $region13: #{tpu_custom_call.1} parent=1 // pred_fallthru
      _
    // Predicated region
    $region14: #{tpu_custom_call.1} parent=1 // pred_check
      _
    $region15: #{tpu_custom_call.1} parent=1 // pred_check_branch
      %45 = sbr.rel (0) target = $region17
    $region16: #{tpu_custom_call.1} parent=1 // pred_region
      _
    $region17: #{tpu_custom_call.1} parent=1 // pred_fallthru
      _
    // Predicated region
    $region18: #{tpu_custom_call.1} parent=1 // pred_check
      _
    $region19: #{tpu_custom_call.1} parent=1 // pred_check_branch
      %47 = sbr.rel (0) target = $region21
    $region20: #{tpu_custom_call.1} parent=1 // pred_region
      %s49 = ssub.s32 512, 512
      %50 = vsyncadd [#allocation9], %s49
      %s51 = sshll.u32 [#allocation8], 4
      %s52 = int_to_ptr.vmem [resolvable:$true] %s51
      %57 = dma.hbm_to_vmem [thread:$0]  %s4, 512, %s52, [#allocation9], 128, 128, 8
    $region21: #{tpu_custom_call.1} parent=1 // pred_fallthru
      _
    // Predicated region
    $region22: #{tpu_custom_call.1} parent=1 // pred_check
      _
    $region23: #{tpu_custom_call.1} parent=1 // pred_check_branch
      %59 = sbr.rel (0) target = $region25
    $region24: #{tpu_custom_call.1} parent=1 // pred_region
      %60 = dma.done [#allocation3], 128
    $region25: #{tpu_custom_call.1} parent=1 // pred_fallthru
      _
    // Predicated region
    $region26: #{tpu_custom_call.1} parent=1 // pred_check
      _
    $region27: #{tpu_custom_call.1} parent=1 // pred_check_branch
      %62 = sbr.rel (0) target = $region29
    $region28: #{tpu_custom_call.1} parent=1 // pred_region
      %63 = dma.done [#allocation6], 128
    $region29: #{tpu_custom_call.1} parent=1 // pred_fallthru
      _
    // Predicated region
    $region30: #{tpu_custom_call.1} parent=1 // pred_check
      _
    $region31: #{tpu_custom_call.1} parent=1 // pred_check_branch
      %65 = sbr.rel (0) target = $region33
    $region32: #{tpu_custom_call.1} parent=1 // pred_region
      %66 = dma.done [#allocation6], 128
    $region33: #{tpu_custom_call.1} parent=1 // pred_fallthru
      _
    // Predicated region
    $region34: #{tpu_custom_call.1} parent=1 // pred_check
      _
    $region35: #{tpu_custom_call.1} parent=1 // pred_check_branch
      %68 = sbr.rel (0) target = $region37
    $region36: #{tpu_custom_call.1} parent=1 // pred_region
      %69 = dma.done [#allocation9], 512
    $region37: #{tpu_custom_call.1} parent=1 // pred_fallthru
      _
    %v70 = vld [vmem:[#allocation5] sm:$0xff]
    %v71 = vld [vmem:[#allocation7] sm:$0xff]
    %vm72 = vcmask 64512
    %v74 = vsel %vm72, %v70, 0
    %76 = vmatprep.subr.mxu0 0.0
    %77 = vmatpush1.msra.mxu0 %v71
    %78 = vmatprep.subr.mxu0 0.0
    %79 = vmatpush1.msra.mxu0 0.0
    %80 = vmatprep.subr.mxu0 0.0
    %81 = vmatpush1.msra.mxu0 0.0
    %82 = vmatprep.subr.mxu0 0.0
    %83 = vmatpush1.msra.mxu0 0.0
    %84 = vmatprep.subr.mxu0 0.0
    %85 = vmatpush1.msra.mxu0 0.0
    %86 = vmatprep.subr.mxu0 0.0
    %87 = vmatpush1.msra.mxu0 0.0
    %88 = vmatprep.subr.mxu0 0.0
    %89 = vmatpush1.msra.mxu0 0.0
    %90 = vmatprep.subr.mxu0 0.0
    %91 = vmatpush1.msra.mxu0 0.0
    %92 = vmatprep.subr.mxu0 0.0
    %93 = vmatpush1.msra.mxu0 0.0
    %94 = vmatprep.subr.mxu0 0.0
    %95 = vmatpush1.msra.mxu0 0.0
    %96 = vmatprep.subr.mxu0 0.0
    %97 = vmatpush1.msra.mxu0 0.0
    %98 = vmatprep.subr.mxu0 0.0
    %99 = vmatpush1.msra.mxu0 0.0
    %100 = vmatprep.subr.mxu0 0.0
    %101 = vmatpush1.msra.mxu0 0.0
    %102 = vmatprep.subr.mxu0 0.0
    %103 = vmatpush1.msra.mxu0 0.0
    %104 = vmatprep.subr.mxu0 0.0
    %105 = vmatpush1.msra.mxu0 0.0
    %106 = vmatprep.subr.mxu0 0.0
    %107 = vmatpush1.msra.mxu0 0.0
    %108 = vmatprep.subr.mxu0 0.0
    %109 = vmatpush1.msra.mxu0 0.0
    %110 = vmatprep.subr.mxu0 0.0
    %111 = vmatpush1.msra.mxu0 0.0
    %112 = vmatprep.subr.mxu0 0.0
    %113 = vmatpush1.msra.mxu0 0.0
    %114 = vmatprep.subr.mxu0 0.0
    %115 = vmatpush1.msra.mxu0 0.0
    %116 = vmatprep.subr.mxu0 0.0
    %117 = vmatpush1.msra.mxu0 0.0
    %118 = vmatprep.subr.mxu0 0.0
    %119 = vmatpush1.msra.mxu0 0.0
    %120 = vmatprep.subr.mxu0 0.0
    %121 = vmatpush1.msra.mxu0 0.0
    %122 = vmatprep.subr.mxu0 0.0
    %123 = vmatpush1.msra.mxu0 0.0
    %124 = vmatprep.subr.mxu0 0.0
    %125 = vmatpush1.msra.mxu0 0.0
    %126 = vmatprep.subr.mxu0 0.0
    %127 = vmatpush1.msra.mxu0 0.0
    %128 = vmatprep.subr.mxu0 0.0
    %129 = vmatpush1.msra.mxu0 0.0
    %130 = vmatprep.subr.mxu0 0.0
    %131 = vmatpush1.msra.mxu0 0.0
    %132 = vmatprep.subr.mxu0 0.0
    %133 = vmatpush1.msra.mxu0 0.0
    %134 = vmatprep.subr.mxu0 0.0
    %135 = vmatpush1.msra.mxu0 0.0
    %136 = vmatprep.subr.mxu0 0.0
    %137 = vmatpush1.msra.mxu0 0.0
    %138 = vmatprep.subr.mxu0 0.0
    %139 = vmatpush1.msra.mxu0 0.0
    %140 = vmatprep.mubr.f32.mxu0 0.0
    %141 = vmatmul.mubr.f32.gmra.mrb[0].mxu0 %v74
    %v142 = vpop.f32.mrb[0].mxu0
    %v143 = vadd.f32 0.0, %v142
    %v144 = vpop.f32.mrb[0].mxu0
    %145 = vdwg.mxu0
    %v146 = vld [vmem:[%s3] sm:$0x1]
    %v148 = vlaneseq
    %v149 = vshrl.u32 %v148, 7
    %v150 = vsub.s32 0, %v149
    %v151 = vrot.slane %v146, %v150
    %v153 = vadd.f32 %v143, %v151
    %v154 = vxor.u32 %v153, 2147483648
    %v155 = vmul.f32 %v154, 1.442695
    %v156 = vpow.pop %v155
    %v157 = vadd.f32 %v156, 1.0
    %v158 = vrcp.pop %v157
    %v159 = vmul.f32 1.0, %v158
    %v160 = vmul.f32 %v153, %v159
    %v161 = vld [vmem:[#allocation2] sm:$0xff]
    %v162 = vld [vmem:[#allocation8] sm:$0xff]
    %v163 = vld [vmem:[#allocation8 + $0x8] sm:$0xff]
    %v164 = vld [vmem:[#allocation8 + $0x10] sm:$0xff]
    %v165 = vld [vmem:[#allocation8 + $0x18] sm:$0xff]
    %vm166 = vcmask 261120
    %v168 = vsel %vm166, %v160, 0
    %170 = vmatprep.subr.mxu0 0.0
    %171 = vmatpush1.msra.mxu0 %v162
    %172 = vmatprep.subr.mxu0 0.0
    %173 = vmatpush1.msra.mxu0 %v163
    %174 = vmatprep.subr.mxu0 0.0
    %175 = vmatpush1.msra.mxu0 %v164
    %176 = vmatprep.subr.mxu0 0.0
    %177 = vmatpush1.msra.mxu0 %v165
    %178 = vmatprep.subr.mxu0 0.0
    %179 = vmatpush1.msra.mxu0 0.0
    %180 = vmatprep.subr.mxu0 0.0
    %181 = vmatpush1.msra.mxu0 0.0
    %182 = vmatprep.subr.mxu0 0.0
    %183 = vmatpush1.msra.mxu0 0.0
    %184 = vmatprep.subr.mxu0 0.0
    %185 = vmatpush1.msra.mxu0 0.0
    %186 = vmatprep.subr.mxu0 0.0
    %187 = vmatpush1.msra.mxu0 0.0
    %188 = vmatprep.subr.mxu0 0.0
    %189 = vmatpush1.msra.mxu0 0.0
    %190 = vmatprep.subr.mxu0 0.0
    %191 = vmatpush1.msra.mxu0 0.0
    %192 = vmatprep.subr.mxu0 0.0
    %193 = vmatpush1.msra.mxu0 0.0
    %194 = vmatprep.subr.mxu0 0.0
    %195 = vmatpush1.msra.mxu0 0.0
    %196 = vmatprep.subr.mxu0 0.0
    %197 = vmatpush1.msra.mxu0 0.0
    %198 = vmatprep.subr.mxu0 0.0
    %199 = vmatpush1.msra.mxu0 0.0
    %200 = vmatprep.subr.mxu0 0.0
    %201 = vmatpush1.msra.mxu0 0.0
    %202 = vmatprep.subr.mxu0 0.0
    %203 = vmatpush1.msra.mxu0 0.0
    %204 = vmatprep.subr.mxu0 0.0
    %205 = vmatpush1.msra.mxu0 0.0
    %206 = vmatprep.subr.mxu0 0.0
    %207 = vmatpush1.msra.mxu0 0.0
    %208 = vmatprep.subr.mxu0 0.0
    %209 = vmatpush1.msra.mxu0 0.0
    %210 = vmatprep.subr.mxu0 0.0
    %211 = vmatpush1.msra.mxu0 0.0
    %212 = vmatprep.subr.mxu0 0.0
    %213 = vmatpush1.msra.mxu0 0.0
    %214 = vmatprep.subr.mxu0 0.0
    %215 = vmatpush1.msra.mxu0 0.0
    %216 = vmatprep.subr.mxu0 0.0
    %217 = vmatpush1.msra.mxu0 0.0
    %218 = vmatprep.subr.mxu0 0.0
    %219 = vmatpush1.msra.mxu0 0.0
    %220 = vmatprep.subr.mxu0 0.0
    %221 = vmatpush1.msra.mxu0 0.0
    %222 = vmatprep.subr.mxu0 0.0
    %223 = vmatpush1.msra.mxu0 0.0
    %224 = vmatprep.subr.mxu0 0.0
    %225 = vmatpush1.msra.mxu0 0.0
    %226 = vmatprep.subr.mxu0 0.0
    %227 = vmatpush1.msra.mxu0 0.0
    %228 = vmatprep.subr.mxu0 0.0
    %229 = vmatpush1.msra.mxu0 0.0
    %230 = vmatprep.subr.mxu0 0.0
    %231 = vmatpush1.msra.mxu0 0.0
    %232 = vmatprep.subr.mxu0 0.0
    %233 = vmatpush1.msra.mxu0 0.0
    %234 = vmatprep.mubr.f32.mxu0 0.0
    %235 = vmatmul.mubr.f32.gmra.mrb[0].mxu0 %v168
    %v236 = vpop.f32.mrb[0].mxu0
    %v237 = vadd.f32 0.0, %v236
    %v238 = vpop.f32.mrb[0].mxu0
    %239 = vdwg.mxu0
    %v240 = vadd.f32 %v161, %v237
    %v241 = vxor.u32 %v240, 2147483648
    %v242 = vmul.f32 %v241, 1.442695
    %v243 = vpow.pop %v242
    %v244 = vadd.f32 %v243, 1.0
    %v245 = vrcp.pop %v244
    %v246 = vmul.f32 1.0, %v245
    %v247 = vmul.f32 %v240, %v246
    %249 = vrot.lane.b32.xlu0 %v247, 32
    %v250 = vpop.permute.xlu0 %249
    %v252 = vmul.f32 %v143, %v250
    %v253 = vsel %vm166, %v247, %v252
    %vm254 = vcmask 523264
    %255 = vst.msk [vmem:[#allocation10] sm:$0xff] %vm254, %v253
    // Predicated region
    $region38: #{tpu_custom_call.1} parent=1 // pred_check
      _
    $region39: #{tpu_custom_call.1} parent=1 // pred_check_branch
      %257 = sbr.rel (0) target = $region41
    $region40: #{tpu_custom_call.1} parent=1 // pred_region
      %s259 = ssub.s32 128, 128
      %260 = vsyncadd [#allocation4], %s259
      %s262 = sshll.u32 [#allocation10], 4
      %s263 = int_to_ptr.vmem [resolvable:$true] %s262
      %265 = dma.vmem_to_hbm [thread:$0]  %s263, 128, %s5, [#allocation4]
    $region41: #{tpu_custom_call.1} parent=1 // pred_fallthru
      _
    // Predicated region
    $region42: #{tpu_custom_call.1} parent=1 // pred_check
      _
    $region43: #{tpu_custom_call.1} parent=1 // pred_check_branch
      %267 = sbr.rel (0) target = $region45
    $region44: #{tpu_custom_call.1} parent=1 // pred_region
      %268 = dma.done [#allocation4], 128
    $region45: #{tpu_custom_call.1} parent=1 // pred_fallthru
      _
    %269 = vsyncpa [#allocation3], 1
    %270 = vsyncpa [#allocation6], 1
    %271 = vsyncpa [#allocation9], 1
    %272 = vsyncpa [#allocation4], 1

</llo_original>
